<compile_context>
chip_gen: v6e
topology: v6e:2x2x1
jax: 0.10.0
libtpu: 0.0.40
codegen_flags: <defaults>
</compile_context>

<pallas_src>
import jax
import jax.numpy as jnp
from jax.experimental import pallas as pl
from jax.experimental.pallas import tpu as pltpu

LANE = 128


def _round_up(x, m):
    return (x + m - 1) // m * m


def _vmem_limit_bytes(single_buffer_bytes):
    """Derive the VMEM request from the actual block sizes (double buffered,
    plus temp/margin), capped to this generation's VMEM capacity."""
    need = int(2 * single_buffer_bytes * 1.75) + (8 << 20)
    try:
        cap = int(pltpu.get_tpu_info().vmem_capacity_bytes)
    except Exception:  # pragma: no cover - conservative fallback (v7x = 64 MiB)
        cap = 64 << 20
    return int(max(32 << 20, min(need, int(cap * 0.9))))


# ----------------------------- Pallas kernels --------------------------------
def _bn_relu_kernel(x_ref, s_ref, b_ref, o_ref):
    # o = relu(x * scale + bias), per-channel scale/bias broadcast over rows.
    o_ref[...] = jnp.maximum(
        x_ref[...].astype(jnp.float32) * s_ref[...] + b_ref[...], 0.0
    ).astype(o_ref.dtype)


def _make_conv3x3_kernel(taps, Ho, Wo, has_bn, res_mode):
    """Direct 3x3 conv: 9 shifted matmuls on a resident activation tile.

    taps: static list of (row_offset, col_offset) into the phase-decomposed,
          spatially padded input tile; tap t pairs with weight slab w_ref[t].
    res_mode: None | "add" (identity residual) | "proj" (fused 1x1 shortcut).
    """
    M = Ho * Wo

    def kernel(*refs):
        i = 0
        x_ref = refs[i]; i += 1
        w_ref = refs[i]; i += 1
        if has_bn:
            s_ref, b_ref = refs[i], refs[i + 1]; i += 2
        r_ref = rw_ref = None
        if res_mode == "add":
            r_ref = refs[i]; i += 1
        elif res_mode == "proj":
            r_ref, rw_ref = refs[i], refs[i + 1]; i += 2
        o_ref = refs[i]

        Ci = x_ref.shape[-1]
        Co = o_ref.shape[-1]

        # 9 shifted windows of the resident tile -> MXU -> f32 accumulator.
        acc = jnp.zeros((M, Co), jnp.float32)
        for t, (r0, c0) in enumerate(taps):
            xs = x_ref[0, pl.ds(r0, Ho), pl.ds(c0, Wo), :]      # (Ho, Wo, Ci)
            acc = acc + jnp.dot(xs.reshape(M, Ci), w_ref[t],
                                preferred_element_type=jnp.float32)

        if res_mode == "proj":
            # Fused 1x1 projection shortcut (10th matmul), never stored to HBM.
            rs = r_ref[0].reshape(M, r_ref.shape[-1])
            acc = acc + jnp.dot(rs, rw_ref[...],
                                preferred_element_type=jnp.float32)

        if has_bn:                       # fused BN2 + ReLU epilogue (f32)
            acc = jnp.maximum(acc * s_ref[...] + b_ref[...], 0.0)

        if res_mode == "add":            # fused identity-residual add
            acc = acc + r_ref[0].reshape(M, Co).astype(jnp.float32)

        o_ref[0] = acc.reshape(Ho, Wo, Co).astype(o_ref.dtype)

    return kernel


# ----------------------------- Pallas wrappers --------------------------------
def bn_relu(x2d, scale, bias, out_dtype, tm=2048):
    """relu(x2d * scale + bias) elementwise; x2d: (M, C), C multiple of 128."""
    M, C = x2d.shape
    tm = min(tm, M)
    blk = tm * C * (x2d.dtype.itemsize + jnp.dtype(out_dtype).itemsize) + 2 * C * 4
    return pl.pallas_call(
        _bn_relu_kernel,
        out_shape=jax.ShapeDtypeStruct((M, C), out_dtype),
        grid_spec=pltpu.PrefetchScalarGridSpec(
            num_scalar_prefetch=0,
            grid=(pl.cdiv(M, tm),),
            in_specs=[
                pl.BlockSpec((tm, C), lambda i: (i, 0)),
                pl.BlockSpec((1, C), lambda i: (0, 0)),
                pl.BlockSpec((1, C), lambda i: (0, 0)),
            ],
            out_specs=pl.BlockSpec((tm, C), lambda i: (i, 0)),
        ),
        compiler_params=pltpu.CompilerParams(
            dimension_semantics=("parallel",),
            vmem_limit_bytes=_vmem_limit_bytes(blk)),
        cost_estimate=pl.CostEstimate(
            flops=2 * M * C, transcendentals=0,
            bytes_accessed=int(M * C * (x2d.dtype.itemsize
                                        + jnp.dtype(out_dtype).itemsize)
                               + 2 * C * 4)),
    )(x2d,
      scale.reshape(1, C).astype(jnp.float32),
      bias.reshape(1, C).astype(jnp.float32))


def conv3x3(x_in, w, taps, Ho, Wo, *, scale=None, bias=None,
            residual=None, res_in=None, res_w=None, out_dtype=jnp.float32):
    """Direct 3x3 conv (one image per grid step) with optional fused epilogue.

    x_in : (N, P*Hq, Wq, Ci)  phase-decomposed, spatially padded activation.
    w    : (9, Ci, Co)        tap-major weights (grid-invariant / resident).
    scale/bias -> fused relu(out*scale+bias);  residual -> fused add;
    res_in/res_w -> fused 1x1 projection shortcut added to the output.
    Ci/Co must be multiples of 128 (caller pads channels).
    """
    N, HqP, Wq, Ci = x_in.shape
    _, _, Co = w.shape
    assert Ci % LANE == 0 and Co % LANE == 0
    esz = x_in.dtype.itemsize

    in_specs = [
        pl.BlockSpec((1, HqP, Wq, Ci), lambda n: (n, 0, 0, 0)),
        # grid-invariant weight: fetched into VMEM once, never re-streamed.
        pl.BlockSpec((9, Ci, Co), lambda n: (0, 0, 0)),
    ]
    args = [x_in, w]
    flops = 2 * N * Ho * Wo * 9 * Ci * Co
    out_blk = Ho * Wo * Co * jnp.dtype(out_dtype).itemsize
    blk = HqP * Wq * Ci * esz + 9 * Ci * Co * esz + out_blk

    has_bn = scale is not None
    if has_bn:
        in_specs += [pl.BlockSpec((1, Co), lambda n: (0, 0)),
                     pl.BlockSpec((1, Co), lambda n: (0, 0))]
        args += [scale.reshape(1, Co).astype(jnp.float32),
                 bias.reshape(1, Co).astype(jnp.float32)]
        blk += 2 * Co * 4

    res_mode = None
    if residual is not None:
        res_mode = "add"
        in_specs += [pl.BlockSpec((1, Ho, Wo, Co), lambda n: (n, 0, 0, 0))]
        args += [residual]
        blk += Ho * Wo * Co * residual.dtype.itemsize
    elif res_in is not None:
        res_mode = "proj"
        Cs = res_in.shape[-1]
        assert Cs % LANE == 0
        in_specs += [pl.BlockSpec((1, Ho, Wo, Cs), lambda n: (n, 0, 0, 0)),
                     pl.BlockSpec((Cs, Co), lambda n: (0, 0))]
        args += [res_in, res_w]
        flops += 2 * N * Ho * Wo * Cs * Co
        blk += Ho * Wo * Cs * res_in.dtype.itemsize + Cs * Co * res_w.dtype.itemsize

    bytes_acc = sum(int(a.size) * a.dtype.itemsize for a in args) + N * out_blk
    kernel = _make_conv3x3_kernel(taps, Ho, Wo, has_bn, res_mode)

    return pl.pallas_call(
        kernel,
        out_shape=jax.ShapeDtypeStruct((N, Ho, Wo, Co), out_dtype),
        grid_spec=pltpu.PrefetchScalarGridSpec(
            num_scalar_prefetch=0,
            grid=(N,),
            in_specs=in_specs,
            out_specs=pl.BlockSpec((1, Ho, Wo, Co), lambda n: (n, 0, 0, 0)),
        ),
        compiler_params=pltpu.CompilerParams(
            dimension_semantics=("parallel",),          # shards batch over TCs
            vmem_limit_bytes=_vmem_limit_bytes(blk)),
        cost_estimate=pl.CostEstimate(flops=int(flops), transcendentals=0,
                                      bytes_accessed=int(bytes_acc)),
    )(*args)


# ------------------------------- JAX glue -------------------------------------
def _conv_taps(stride, Hq):
    """Static (row_offset, col_offset) per 3x3 tap into the phase-decomposed
    input; tap index order (dy-major, dx-minor) matches _prep_conv3_weight."""
    taps = []
    for dy in range(3):
        for dx in range(3):
            ph = (dy % stride) * stride + (dx % stride)
            taps.append((ph * Hq + dy // stride, dx // stride))
    return taps


def _phase_decompose(xp, stride, Ho, Wo):
    """xp: spatially padded NHWC.  For stride>1, split into stride^2 parity
    slabs stacked along the row axis so every tap is a unit-stride window
    (no strided in-kernel loads).  Cheap: total bytes ~= one copy of xp."""
    if stride == 1:
        return xp, xp.shape[1]
    Hq = Ho + (2 + stride - 1) // stride
    Wq = Wo + (2 + stride - 1) // stride
    slabs = []
    for pr in range(stride):
        for pc in range(stride):
            sl = xp[:, pr::stride, pc::stride, :][:, :Hq, :Wq, :]
            pad_h, pad_w = Hq - sl.shape[1], Wq - sl.shape[2]
            slabs.append(jnp.pad(sl, ((0, 0), (0, pad_h), (0, pad_w), (0, 0))))
    return jnp.concatenate(slabs, axis=1), Hq


def _prep_conv3_weight(w, ci_pad, co_pad, dtype):
    """w: (O, I, 3, 3) -> zero-pad channels -> (9, ci_pad, co_pad), tap-major."""
    O, I, kh, kw = w.shape
    wp = jnp.pad(w, ((0, co_pad - O), (0, ci_pad - I), (0, 0), (0, 0)))
    wp = jnp.transpose(wp, (2, 3, 1, 0)).reshape(kh * kw, ci_pad, co_pad)
    return wp.astype(dtype)


def _prep_conv1x1_weight(w, ci_pad, co_pad, dtype):
    O, I, _, _ = w.shape
    wp = jnp.pad(w[:, :, 0, 0], ((0, co_pad - O), (0, ci_pad - I)))
    return jnp.transpose(wp, (1, 0)).astype(dtype)


def _fold_bn(gamma, beta, mean, var, eps=1e-5):
    scale = gamma / jnp.sqrt(var + eps)
    return scale, beta - mean * scale


def _pad_vec(v, cp):
    return jnp.pad(v, (0, cp - v.shape[0]))


def init_basic_block(key, in_planes, out_planes):
    ks = jax.random.split(key, 12)
    p = {
        "bn1_gamma": jax.random.uniform(ks[0], (in_planes,), jnp.float32, 0.5, 1.5),
        "bn1_beta": 0.1 * jax.random.normal(ks[1], (in_planes,), jnp.float32),
        "bn1_mean": 0.1 * jax.random.normal(ks[2], (in_planes,), jnp.float32),
        "bn1_var": jax.random.uniform(ks[3], (in_planes,), jnp.float32, 0.5, 1.5),
        "conv1_w": 0.1 * jax.random.normal(ks[4], (out_planes, in_planes, 3, 3), jnp.float32),
        "bn2_gamma": jax.random.uniform(ks[5], (out_planes,), jnp.float32, 0.5, 1.5),
        "bn2_beta": 0.1 * jax.random.normal(ks[6], (out_planes,), jnp.float32),
        "bn2_mean": 0.1 * jax.random.normal(ks[7], (out_planes,), jnp.float32),
        "bn2_var": jax.random.uniform(ks[8], (out_planes,), jnp.float32, 0.5, 1.5),
        "conv2_w": 0.1 * jax.random.normal(ks[9], (out_planes, out_planes, 3, 3), jnp.float32),
    }
    if in_planes != out_planes:
        p["convs_w"] = 0.1 * jax.random.normal(
            ks[10], (out_planes, in_planes, 1, 1), jnp.float32)
    return p


def basic_block_forward(params, x_nchw, stride, compute_dtype=jnp.bfloat16):
    """Pallas-backed forward. x_nchw: (N, Cin, H, W) float32. Returns NCHW f32."""
    in_planes = x_nchw.shape[1]
    out_planes = params["conv1_w"].shape[0]
    equal = in_planes == out_planes
    if equal:
        assert stride == 1, "identity shortcut requires stride == 1"

    Cp = _round_up(in_planes, LANE)    # lane-dense input channels
    Cop = _round_up(out_planes, LANE)  # lane-dense output channels

    x = jnp.transpose(x_nchw, (0, 2, 3, 1)).astype(jnp.float32)  # NHWC
    N, H, W, _ = x.shape
    Ho = (H + 2 - 3) // stride + 1
    Wo = (W + 2 - 3) // stride + 1

    s1, b1 = _fold_bn(params["bn1_gamma"], params["bn1_beta"],
                      params["bn1_mean"], params["bn1_var"])
    s2, b2 = _fold_bn(params["bn2_gamma"], params["bn2_beta"],
                      params["bn2_mean"], params["bn2_var"])
    s1p, b1p = _pad_vec(s1, Cp), _pad_vec(b1, Cp)
    s2p, b2p = _pad_vec(s2, Cop), _pad_vec(b2, Cop)

    xpad_c = jnp.pad(x, ((0, 0), (0, 0), (0, 0), (0, Cp - in_planes)))

    # relu(bn1(x)) applied BEFORE spatial padding so conv zero-padding stays 0.
    a = bn_relu(xpad_c.reshape(N * H * W, Cp), s1p, b1p, compute_dtype)
    a = a.reshape(N, H, W, Cp)

    # conv1 (3x3, stride) — direct shifted-matmul conv, fused BN2+ReLU epilogue.
    a_sp = jnp.pad(a, ((0, 0), (1, 1), (1, 1), (0, 0)))
    x1_in, Hq1 = _phase_decompose(a_sp, stride, Ho, Wo)
    taps1 = _conv_taps(stride, Hq1)
    w1 = _prep_conv3_weight(params["conv1_w"], Cp, Cop, compute_dtype)
    y1 = conv3x3(x1_in, w1, taps1, Ho, Wo, scale=s2p, bias=b2p,
                 out_dtype=compute_dtype)
    # y1 == relu(bn2(conv1(relu(bn1(x))))); padded channels are exactly zero.

    # conv2 (3x3, stride 1) with the shortcut fused into its epilogue.
    y1_sp = jnp.pad(y1, ((0, 0), (1, 1), (1, 1), (0, 0)))
    x2_in, Hq2 = _phase_decompose(y1_sp, 1, Ho, Wo)
    taps2 = _conv_taps(1, Hq2)
    w2 = _prep_conv3_weight(params["conv2_w"], Cop, Cop, compute_dtype)

    if equal:
        # identity shortcut: original x added in-kernel (no extra HBM pass).
        y2 = conv3x3(x2_in, w2, taps2, Ho, Wo,
                     residual=xpad_c.astype(compute_dtype),
                     out_dtype=jnp.float32)
    else:
        # projection shortcut: 1x1 conv fused into conv2's kernel epilogue.
        ws = _prep_conv1x1_weight(params["convs_w"], Cp, Cop, compute_dtype)
        a_sub = a[:, ::stride, ::stride, :]
        y2 = conv3x3(x2_in, w2, taps2, Ho, Wo,
                     res_in=a_sub, res_w=ws, out_dtype=jnp.float32)

    # TODO(synk): for chained blocks keep NHWC and defer this crop + transpose.
    return jnp.transpose(y2[..., :out_planes], (0, 3, 1, 2))  # back to NCHW


# --------------------------- pure-JAX reference -------------------------------
def reference_forward(params, x_nchw, stride, eps=1e-5):
    x = x_nchw.astype(jnp.float32)
    in_planes = x.shape[1]
    out_planes = params["conv1_w"].shape[0]
    equal = in_planes == out_planes

    def bn(t, g, b, m, v):
        sh = (1, -1, 1, 1)
        return (t - m.reshape(sh)) / jnp.sqrt(v.reshape(sh) + eps) * g.reshape(sh) + b.reshape(sh)

    def conv(t, w, s, pad):
        return jax.lax.conv_general_dilated(
            t, w, (s, s), [(pad, pad), (pad, pad)],
            dimension_numbers=("NCHW", "OIHW", "NCHW"))

    a = jax.nn.relu(bn(x, params["bn1_gamma"], params["bn1_beta"],
                       params["bn1_mean"], params["bn1_var"]))
    shortcut_in = x if equal else a
    out = conv(a, params["conv1_w"], stride, 1)
    out = jax.nn.relu(bn(out, params["bn2_gamma"], params["bn2_beta"],
                         params["bn2_mean"], params["bn2_var"]))
    out = conv(out, params["conv2_w"], 1, 1)
    sc = shortcut_in if equal else conv(shortcut_in, params["convs_w"], stride, 0)
    return sc + out


# ----------------------------------- main -------------------------------------
if __name__ == "__main__":
    key = jax.random.PRNGKey(0)
    k_x, k_p, k_x2, k_p2 = jax.random.split(key, 4)

    # Case 1: widening block (in != out), stride 2 — fused 1x1 conv shortcut.
    in_planes, out_planes, stride = 4, 8, 2
    x = jax.random.normal(k_x, (2, in_planes, 16, 16), jnp.float32)  # NCHW
    params = init_basic_block(k_p, in_planes, out_planes)

    out = jax.block_until_ready(
        basic_block_forward(params, x, stride, compute_dtype=jnp.float32))
    ref = jax.block_until_ready(reference_forward(params, x, stride))
    assert out.shape == ref.shape == (2, out_planes, 8, 8), out.shape
    assert jnp.allclose(out, ref, atol=1e-4, rtol=1e-4), float(
        jnp.max(jnp.abs(out - ref)))

    # Case 2: identity block (in == out), stride 1.
    params2 = init_basic_block(k_p2, out_planes, out_planes)
    x2 = jax.random.normal(k_x2, (2, out_planes, 8, 8), jnp.float32)
    out2 = jax.block_until_ready(
        basic_block_forward(params2, x2, 1, compute_dtype=jnp.float32))
    ref2 = jax.block_until_ready(reference_forward(params2, x2, 1))
    assert jnp.allclose(out2, ref2, atol=1e-4, rtol=1e-4), float(
        jnp.max(jnp.abs(out2 - ref2)))

    # Case 3: default bf16 storage path (half the HBM bytes); loose check.
    out_bf = jax.block_until_ready(basic_block_forward(params, x, stride))
    assert jnp.allclose(out_bf, ref, atol=1e-1, rtol=1e-1), float(
        jnp.max(jnp.abs(out_bf - ref)))

    print("KERNEL_OK")
</pallas_src>

<mosaic_0001>
module attributes {stable_mosaic.version = 11 : i64} {
  func.func @_bn_relu_kernel(%arg0: i32, %arg1: memref<512x128xf32, #tpu.memory_space<vmem>>, %arg2: memref<1x128xf32, #tpu.memory_space<vmem>>, %arg3: memref<1x128xf32, #tpu.memory_space<vmem>>, %arg4: memref<512x128xf32, #tpu.memory_space<vmem>>) attributes {dimension_semantics = [#tpu.dimension_semantics<parallel>], iteration_bounds = array<i64: 1>, scalar_prefetch = 0 : i64, scratch_operands = 0 : i64, tpu.core_type = #tpu.core_type<tc>, window_params = [{transform_indices = @transform_0, window_bounds = array<i64: 512, 128>}, {pipeline_mode = #tpu.pipeline_mode<synchronous>, transform_indices = @transform_1, window_bounds = array<i64: 1, 128>}, {pipeline_mode = #tpu.pipeline_mode<synchronous>, transform_indices = @transform_2, window_bounds = array<i64: 1, 128>}, {transform_indices = @transform_3, window_bounds = array<i64: 512, 128>}]} {
    %c0 = arith.constant 0 : index
    %c0_0 = arith.constant 0 : index
    %0 = vector.load %arg1[%c0, %c0_0] : memref<512x128xf32, #tpu.memory_space<vmem>>, vector<512x128xf32>
    %c0_1 = arith.constant 0 : index
    %c0_2 = arith.constant 0 : index
    %1 = vector.load %arg2[%c0_1, %c0_2] : memref<1x128xf32, #tpu.memory_space<vmem>>, vector<1x128xf32>
    %2 = vector.broadcast %1 : vector<1x128xf32> to vector<512x128xf32>
    %3 = arith.mulf %0, %2 : vector<512x128xf32>
    %c0_3 = arith.constant 0 : index
    %c0_4 = arith.constant 0 : index
    %4 = vector.load %arg3[%c0_3, %c0_4] : memref<1x128xf32, #tpu.memory_space<vmem>>, vector<1x128xf32>
    %5 = vector.broadcast %4 : vector<1x128xf32> to vector<512x128xf32>
    %6 = arith.addf %3, %5 : vector<512x128xf32>
    %cst = arith.constant 0.000000e+00 : f32
    %7 = vector.broadcast %cst : f32 to vector<512x128xf32>
    %8 = arith.maximumf %6, %7 : vector<512x128xf32>
    %c0_5 = arith.constant 0 : index
    %c0_6 = arith.constant 0 : index
    %9 = vector.load %arg4[%c0_5, %c0_6] : memref<512x128xf32, #tpu.memory_space<vmem>>, vector<512x128xf32>
    tpu.vector_store %arg4[%c0_5, %c0_6], %8 {strides = array<i32>} : memref<512x128xf32, #tpu.memory_space<vmem>>, vector<512x128xf32>,
    return
  }
  func.func @transform_0(%arg0: i32) -> (i32, i32) {
    %c0_i32 = arith.constant 0 : i32
    %c0_i32_0 = arith.constant 0 : i32
    return %arg0, %c0_i32 : i32, i32
  }
  func.func @transform_1(%arg0: i32) -> (i32, i32) {
    %c0_i32 = arith.constant 0 : i32
    %c0_i32_0 = arith.constant 0 : i32
    %c0_i32_1 = arith.constant 0 : i32
    return %c0_i32, %c0_i32_0 : i32, i32
  }
  func.func @transform_2(%arg0: i32) -> (i32, i32) {
    %c0_i32 = arith.constant 0 : i32
    %c0_i32_0 = arith.constant 0 : i32
    %c0_i32_1 = arith.constant 0 : i32
    return %c0_i32, %c0_i32_0 : i32, i32
  }
  func.func @transform_3(%arg0: i32) -> (i32, i32) {
    %c0_i32 = arith.constant 0 : i32
    %c0_i32_0 = arith.constant 0 : i32
    return %arg0, %c0_i32 : i32, i32
  }
}

</mosaic_0001>

<llo_original>
// kernel: tpu_custom_call.1
$region0: #{tpu_custom_call.1}
  #allocation0 [shape = 'u32[]', space=smem, size = 0x4, offset = 0x4, fixed_abs, tag = 'smem constant byte address 0x4 - core index']
  #allocation1 [shape = 'u32[144,128]{1,0:T(1,128)}', space=vmem, size = 0x12000, scoped, tag = 'internal scratch']
  %s0 = inlined_call_operand.hbm [shape: f32[512,128], index: 0, kind: input, shape index: {}]
  %s1 = inlined_call_operand.vmem [shape: f32[1,128], index: 1, kind: input, shape index: {}]
  %s2 = inlined_call_operand.vmem [shape: f32[1,128], index: 2, kind: input, shape index: {}]
  %s3 = inlined_call_operand.hbm [shape: f32[512,128], index: 3, kind: output, shape index: {}]
  %s4 = sld [smem:[#allocation0]]
  $region26: #{tpu_custom_call.1} parent=0
    _
  %s6 = ssub.s32 1, %s4
  %s7 = scalar_select 0, %s6, %s4
  $region1: #{tpu_custom_call.1} parent=0
    #allocation2 [shape = 'u8[262144]{0}', space=vmem, size = 0x40000, scoped, tag = 'input window, operand 0, single buffered']
    #allocation3 [shape = 's32[1]{0}', space=sflag, size = 0x4, scoped, tag = 'scoped memory for tpu_custom_call.1']
    #allocation4 [shape = 's32[1]{0}', space=sflag, size = 0x4, scoped, tag = 'scoped memory for tpu_custom_call.1']
    #allocation5 [shape = 'u8[262144]{0}', space=vmem, size = 0x40000, scoped, tag = 'output window, operand 0, single buffered']
    %8 = vsyncpa [#allocation3], 0
    %9 = vsyncpa [#allocation4], 0
    // Predicated region
    $region2: #{tpu_custom_call.1} parent=1 // pred_check
      _
    $region3: #{tpu_custom_call.1} parent=1 // pred_check_branch
      %11 = sbr.rel (0) target = $region5
    $region4: #{tpu_custom_call.1} parent=1 // pred_region
      %s13 = ssub.s32 8192, 8192
      %14 = vsyncadd [#allocation3], %s13
      %s15 = sshll.u32 [#allocation2], 4
      %s16 = int_to_ptr.vmem [resolvable:$true] %s15
      %21 = dma.hbm_to_vmem [thread:$0]  %s0, 8192, %s16, [#allocation3], 128, 128, 8
    $region5: #{tpu_custom_call.1} parent=1 // pred_fallthru
      _
    // Predicated region
    $region6: #{tpu_custom_call.1} parent=1 // pred_check
      _
    $region7: #{tpu_custom_call.1} parent=1 // pred_check_branch
      %23 = sbr.rel (0) target = $region9
    $region8: #{tpu_custom_call.1} parent=1 // pred_region
      _
    $region9: #{tpu_custom_call.1} parent=1 // pred_fallthru
      _
    // Predicated region
    $region10: #{tpu_custom_call.1} parent=1 // pred_check
      _
    $region11: #{tpu_custom_call.1} parent=1 // pred_check_branch
      %25 = sbr.rel (0) target = $region13
    $region12: #{tpu_custom_call.1} parent=1 // pred_region
      _
    $region13: #{tpu_custom_call.1} parent=1 // pred_fallthru
      _
    // Predicated region
    $region14: #{tpu_custom_call.1} parent=1 // pred_check
      _
    $region15: #{tpu_custom_call.1} parent=1 // pred_check_branch
      %27 = sbr.rel (0) target = $region17
    $region16: #{tpu_custom_call.1} parent=1 // pred_region
      %28 = dma.done [#allocation3], 8192
    $region17: #{tpu_custom_call.1} parent=1 // pred_fallthru
      _
    %v29 = vld [vmem:[#allocation2] sm:$0xff]
    %v30 = vld [vmem:[#allocation2 + $0x8] sm:$0xff]
    %v31 = vld [vmem:[#allocation2 + $0x10] sm:$0xff]
    %v32 = vld [vmem:[#allocation2 + $0x18] sm:$0xff]
    %v33 = vld [vmem:[#allocation2 + $0x20] sm:$0xff]
    %v34 = vld [vmem:[#allocation2 + $0x28] sm:$0xff]
    %v35 = vld [vmem:[#allocation2 + $0x30] sm:$0xff]
    %v36 = vld [vmem:[#allocation2 + $0x38] sm:$0xff]
    %v37 = vld [vmem:[#allocation2 + $0x40] sm:$0xff]
    %v38 = vld [vmem:[#allocation2 + $0x48] sm:$0xff]
    %v39 = vld [vmem:[#allocation2 + $0x50] sm:$0xff]
    %v40 = vld [vmem:[#allocation2 + $0x58] sm:$0xff]
    %v41 = vld [vmem:[#allocation2 + $0x60] sm:$0xff]
    %v42 = vld [vmem:[#allocation2 + $0x68] sm:$0xff]
    %v43 = vld [vmem:[#allocation2 + $0x70] sm:$0xff]
    %v44 = vld [vmem:[#allocation2 + $0x78] sm:$0xff]
    %v45 = vld [vmem:[#allocation2 + $0x80] sm:$0xff]
    %v46 = vld [vmem:[#allocation2 + $0x88] sm:$0xff]
    %v47 = vld [vmem:[#allocation2 + $0x90] sm:$0xff]
    %v48 = vld [vmem:[#allocation2 + $0x98] sm:$0xff]
    %v49 = vld [vmem:[#allocation2 + $0xa0] sm:$0xff]
    %v50 = vld [vmem:[#allocation2 + $0xa8] sm:$0xff]
    %v51 = vld [vmem:[#allocation2 + $0xb0] sm:$0xff]
    %v52 = vld [vmem:[#allocation2 + $0xb8] sm:$0xff]
    %v53 = vld [vmem:[#allocation2 + $0xc0] sm:$0xff]
    %v54 = vld [vmem:[#allocation2 + $0xc8] sm:$0xff]
    %v55 = vld [vmem:[#allocation2 + $0xd0] sm:$0xff]
    %v56 = vld [vmem:[#allocation2 + $0xd8] sm:$0xff]
    %v57 = vld [vmem:[#allocation2 + $0xe0] sm:$0xff]
    %v58 = vld [vmem:[#allocation2 + $0xe8] sm:$0xff]
    %v59 = vld [vmem:[#allocation2 + $0xf0] sm:$0xff]
    %v60 = vld [vmem:[#allocation2 + $0xf8] sm:$0xff]
    %v61 = vld [vmem:[#allocation2 + $0x100] sm:$0xff]
    %v62 = vld [vmem:[#allocation2 + $0x108] sm:$0xff]
    %v63 = vld [vmem:[#allocation2 + $0x110] sm:$0xff]
    %v64 = vld [vmem:[#allocation2 + $0x118] sm:$0xff]
    %v65 = vld [vmem:[#allocation2 + $0x120] sm:$0xff]
    %v66 = vld [vmem:[#allocation2 + $0x128] sm:$0xff]
    %v67 = vld [vmem:[#allocation2 + $0x130] sm:$0xff]
    %v68 = vld [vmem:[#allocation2 + $0x138] sm:$0xff]
    %v69 = vld [vmem:[#allocation2 + $0x140] sm:$0xff]
    %v70 = vld [vmem:[#allocation2 + $0x148] sm:$0xff]
    %v71 = vld [vmem:[#allocation2 + $0x150] sm:$0xff]
    %v72 = vld [vmem:[#allocation2 + $0x158] sm:$0xff]
    %v73 = vld [vmem:[#allocation2 + $0x160] sm:$0xff]
    %v74 = vld [vmem:[#allocation2 + $0x168] sm:$0xff]
    %v75 = vld [vmem:[#allocation2 + $0x170] sm:$0xff]
    %v76 = vld [vmem:[#allocation2 + $0x178] sm:$0xff]
    %v77 = vld [vmem:[#allocation2 + $0x180] sm:$0xff]
    %v78 = vld [vmem:[#allocation2 + $0x188] sm:$0xff]
    %v79 = vld [vmem:[#allocation2 + $0x190] sm:$0xff]
    %v80 = vld [vmem:[#allocation2 + $0x198] sm:$0xff]
    %v81 = vld [vmem:[#allocation2 + $0x1a0] sm:$0xff]
    %v82 = vld [vmem:[#allocation2 + $0x1a8] sm:$0xff]
    %v83 = vld [vmem:[#allocation2 + $0x1b0] sm:$0xff]
    %v84 = vld [vmem:[#allocation2 + $0x1b8] sm:$0xff]
    %v85 = vld [vmem:[#allocation2 + $0x1c0] sm:$0xff]
    %v86 = vld [vmem:[#allocation2 + $0x1c8] sm:$0xff]
    %v87 = vld [vmem:[#allocation2 + $0x1d0] sm:$0xff]
    %v88 = vld [vmem:[#allocation2 + $0x1d8] sm:$0xff]
    %v89 = vld [vmem:[#allocation2 + $0x1e0] sm:$0xff]
    %v90 = vld [vmem:[#allocation2 + $0x1e8] sm:$0xff]
    %v91 = vld [vmem:[#allocation2 + $0x1f0] sm:$0xff]
    %v92 = vld [vmem:[#allocation2 + $0x1f8] sm:$0xff]
    %v93 = vld [vmem:[%s1] sm:$0x1]
    %v95 = vlaneseq
    %v96 = vshrl.u32 %v95, 7
    %v97 = vsub.s32 0, %v96
    %v98 = vrot.slane %v93, %v97
    %v100 = vmul.f32 %v29, %v98
    %v101 = vmul.f32 %v30, %v98
    %v102 = vmul.f32 %v31, %v98
    %v103 = vmul.f32 %v32, %v98
    %v104 = vmul.f32 %v33, %v98
    %v105 = vmul.f32 %v34, %v98
    %v106 = vmul.f32 %v35, %v98
    %v107 = vmul.f32 %v36, %v98
    %v108 = vmul.f32 %v37, %v98
    %v109 = vmul.f32 %v38, %v98
    %v110 = vmul.f32 %v39, %v98
    %v111 = vmul.f32 %v40, %v98
    %v112 = vmul.f32 %v41, %v98
    %v113 = vmul.f32 %v42, %v98
    %v114 = vmul.f32 %v43, %v98
    %v115 = vmul.f32 %v44, %v98
    %v116 = vmul.f32 %v45, %v98
    %v117 = vmul.f32 %v46, %v98
    %v118 = vmul.f32 %v47, %v98
    %v119 = vmul.f32 %v48, %v98
    %v120 = vmul.f32 %v49, %v98
    %v121 = vmul.f32 %v50, %v98
    %v122 = vmul.f32 %v51, %v98
    %v123 = vmul.f32 %v52, %v98
    %v124 = vmul.f32 %v53, %v98
    %v125 = vmul.f32 %v54, %v98
    %v126 = vmul.f32 %v55, %v98
    %v127 = vmul.f32 %v56, %v98
    %v128 = vmul.f32 %v57, %v98
    %v129 = vmul.f32 %v58, %v98
    %v130 = vmul.f32 %v59, %v98
    %v131 = vmul.f32 %v60, %v98
    %v132 = vmul.f32 %v61, %v98
    %v133 = vmul.f32 %v62, %v98
    %v134 = vmul.f32 %v63, %v98
    %v135 = vmul.f32 %v64, %v98
    %v136 = vmul.f32 %v65, %v98
    %v137 = vmul.f32 %v66, %v98
    %v138 = vmul.f32 %v67, %v98
    %v139 = vmul.f32 %v68, %v98
    %v140 = vmul.f32 %v69, %v98
    %v141 = vmul.f32 %v70, %v98
    %v142 = vmul.f32 %v71, %v98
    %v143 = vmul.f32 %v72, %v98
    %v144 = vmul.f32 %v73, %v98
    %v145 = vmul.f32 %v74, %v98
    %v146 = vmul.f32 %v75, %v98
    %v147 = vmul.f32 %v76, %v98
    %v148 = vmul.f32 %v77, %v98
    %v149 = vmul.f32 %v78, %v98
    %v150 = vmul.f32 %v79, %v98
    %v151 = vmul.f32 %v80, %v98
    %v152 = vmul.f32 %v81, %v98
    %v153 = vmul.f32 %v82, %v98
    %v154 = vmul.f32 %v83, %v98
    %v155 = vmul.f32 %v84, %v98
    %v156 = vmul.f32 %v85, %v98
    %v157 = vmul.f32 %v86, %v98
    %v158 = vmul.f32 %v87, %v98
    %v159 = vmul.f32 %v88, %v98
    %v160 = vmul.f32 %v89, %v98
    %v161 = vmul.f32 %v90, %v98
    %v162 = vmul.f32 %v91, %v98
    %v163 = vmul.f32 %v92, %v98
    %v164 = vld [vmem:[%s2] sm:$0x1]
    %v166 = vlaneseq
    %v167 = vshrl.u32 %v166, 7
    %v168 = vsub.s32 0, %v167
    %v169 = vrot.slane %v164, %v168
    %v171 = vadd.f32 %v100, %v169
    %v172 = vadd.f32 %v101, %v169
    %v173 = vadd.f32 %v102, %v169
    %v174 = vadd.f32 %v103, %v169
    %v175 = vadd.f32 %v104, %v169
    %v176 = vadd.f32 %v105, %v169
    %v177 = vadd.f32 %v106, %v169
    %v178 = vadd.f32 %v107, %v169
    %v179 = vadd.f32 %v108, %v169
    %v180 = vadd.f32 %v109, %v169
    %v181 = vadd.f32 %v110, %v169
    %v182 = vadd.f32 %v111, %v169
    %v183 = vadd.f32 %v112, %v169
    %v184 = vadd.f32 %v113, %v169
    %v185 = vadd.f32 %v114, %v169
    %v186 = vadd.f32 %v115, %v169
    %v187 = vadd.f32 %v116, %v169
    %v188 = vadd.f32 %v117, %v169
    %v189 = vadd.f32 %v118, %v169
    %v190 = vadd.f32 %v119, %v169
    %v191 = vadd.f32 %v120, %v169
    %v192 = vadd.f32 %v121, %v169
    %v193 = vadd.f32 %v122, %v169
    %v194 = vadd.f32 %v123, %v169
    %v195 = vadd.f32 %v124, %v169
    %v196 = vadd.f32 %v125, %v169
    %v197 = vadd.f32 %v126, %v169
    %v198 = vadd.f32 %v127, %v169
    %v199 = vadd.f32 %v128, %v169
    %v200 = vadd.f32 %v129, %v169
    %v201 = vadd.f32 %v130, %v169
    %v202 = vadd.f32 %v131, %v169
    %v203 = vadd.f32 %v132, %v169
    %v204 = vadd.f32 %v133, %v169
    %v205 = vadd.f32 %v134, %v169
    %v206 = vadd.f32 %v135, %v169
    %v207 = vadd.f32 %v136, %v169
    %v208 = vadd.f32 %v137, %v169
    %v209 = vadd.f32 %v138, %v169
    %v210 = vadd.f32 %v139, %v169
    %v211 = vadd.f32 %v140, %v169
    %v212 = vadd.f32 %v141, %v169
    %v213 = vadd.f32 %v142, %v169
    %v214 = vadd.f32 %v143, %v169
    %v215 = vadd.f32 %v144, %v169
    %v216 = vadd.f32 %v145, %v169
    %v217 = vadd.f32 %v146, %v169
    %v218 = vadd.f32 %v147, %v169
    %v219 = vadd.f32 %v148, %v169
    %v220 = vadd.f32 %v149, %v169
    %v221 = vadd.f32 %v150, %v169
    %v222 = vadd.f32 %v151, %v169
    %v223 = vadd.f32 %v152, %v169
    %v224 = vadd.f32 %v153, %v169
    %v225 = vadd.f32 %v154, %v169
    %v226 = vadd.f32 %v155, %v169
    %v227 = vadd.f32 %v156, %v169
    %v228 = vadd.f32 %v157, %v169
    %v229 = vadd.f32 %v158, %v169
    %v230 = vadd.f32 %v159, %v169
    %v231 = vadd.f32 %v160, %v169
    %v232 = vadd.f32 %v161, %v169
    %v233 = vadd.f32 %v162, %v169
    %v234 = vadd.f32 %v163, %v169
    %v235 = vmax.f32 %v171, 0.0
    %v236 = vmax.f32 %v172, 0.0
    %v237 = vmax.f32 %v173, 0.0
    %v238 = vmax.f32 %v174, 0.0
    %v239 = vmax.f32 %v175, 0.0
    %v240 = vmax.f32 %v176, 0.0
    %v241 = vmax.f32 %v177, 0.0
    %v242 = vmax.f32 %v178, 0.0
    %v243 = vmax.f32 %v179, 0.0
    %v244 = vmax.f32 %v180, 0.0
    %v245 = vmax.f32 %v181, 0.0
    %v246 = vmax.f32 %v182, 0.0
    %v247 = vmax.f32 %v183, 0.0
    %v248 = vmax.f32 %v184, 0.0
    %v249 = vmax.f32 %v185, 0.0
    %v250 = vmax.f32 %v186, 0.0
    %v251 = vmax.f32 %v187, 0.0
    %v252 = vmax.f32 %v188, 0.0
    %v253 = vmax.f32 %v189, 0.0
    %v254 = vmax.f32 %v190, 0.0
    %v255 = vmax.f32 %v191, 0.0
    %v256 = vmax.f32 %v192, 0.0
    %v257 = vmax.f32 %v193, 0.0
    %v258 = vmax.f32 %v194, 0.0
    %v259 = vmax.f32 %v195, 0.0
    %v260 = vmax.f32 %v196, 0.0
    %v261 = vmax.f32 %v197, 0.0
    %v262 = vmax.f32 %v198, 0.0
    %v263 = vmax.f32 %v199, 0.0
    %v264 = vmax.f32 %v200, 0.0
    %v265 = vmax.f32 %v201, 0.0
    %v266 = vmax.f32 %v202, 0.0
    %v267 = vmax.f32 %v203, 0.0
    %v268 = vmax.f32 %v204, 0.0
    %v269 = vmax.f32 %v205, 0.0
    %v270 = vmax.f32 %v206, 0.0
    %v271 = vmax.f32 %v207, 0.0
    %v272 = vmax.f32 %v208, 0.0
    %v273 = vmax.f32 %v209, 0.0
    %v274 = vmax.f32 %v210, 0.0
    %v275 = vmax.f32 %v211, 0.0
    %v276 = vmax.f32 %v212, 0.0
    %v277 = vmax.f32 %v213, 0.0
    %v278 = vmax.f32 %v214, 0.0
    %v279 = vmax.f32 %v215, 0.0
    %v280 = vmax.f32 %v216, 0.0
    %v281 = vmax.f32 %v217, 0.0
    %v282 = vmax.f32 %v218, 0.0
    %v283 = vmax.f32 %v219, 0.0
    %v284 = vmax.f32 %v220, 0.0
    %v285 = vmax.f32 %v221, 0.0
    %v286 = vmax.f32 %v222, 0.0
    %v287 = vmax.f32 %v223, 0.0
    %v288 = vmax.f32 %v224, 0.0
    %v289 = vmax.f32 %v225, 0.0
    %v290 = vmax.f32 %v226, 0.0
    %v291 = vmax.f32 %v227, 0.0
    %v292 = vmax.f32 %v228, 0.0
    %v293 = vmax.f32 %v229, 0.0
    %v294 = vmax.f32 %v230, 0.0
    %v295 = vmax.f32 %v231, 0.0
    %v296 = vmax.f32 %v232, 0.0
    %v297 = vmax.f32 %v233, 0.0
    %v298 = vmax.f32 %v234, 0.0
    %299 = vst [vmem:[#allocation5] sm:$0xff] %v235
    %300 = vst [vmem:[#allocation5 + $0x8] sm:$0xff] %v236
    %301 = vst [vmem:[#allocation5 + $0x10] sm:$0xff] %v237
    %302 = vst [vmem:[#allocation5 + $0x18] sm:$0xff] %v238
    %303 = vst [vmem:[#allocation5 + $0x20] sm:$0xff] %v239
    %304 = vst [vmem:[#allocation5 + $0x28] sm:$0xff] %v240
    %305 = vst [vmem:[#allocation5 + $0x30] sm:$0xff] %v241
    %306 = vst [vmem:[#allocation5 + $0x38] sm:$0xff] %v242
    %307 = vst [vmem:[#allocation5 + $0x40] sm:$0xff] %v243
    %308 = vst [vmem:[#allocation5 + $0x48] sm:$0xff] %v244
    %309 = vst [vmem:[#allocation5 + $0x50] sm:$0xff] %v245
    %310 = vst [vmem:[#allocation5 + $0x58] sm:$0xff] %v246
    %311 = vst [vmem:[#allocation5 + $0x60] sm:$0xff] %v247
    %312 = vst [vmem:[#allocation5 + $0x68] sm:$0xff] %v248
    %313 = vst [vmem:[#allocation5 + $0x70] sm:$0xff] %v249
    %314 = vst [vmem:[#allocation5 + $0x78] sm:$0xff] %v250
    %315 = vst [vmem:[#allocation5 + $0x80] sm:$0xff] %v251
    %316 = vst [vmem:[#allocation5 + $0x88] sm:$0xff] %v252
    %317 = vst [vmem:[#allocation5 + $0x90] sm:$0xff] %v253
    %318 = vst [vmem:[#allocation5 + $0x98] sm:$0xff] %v254
    %319 = vst [vmem:[#allocation5 + $0xa0] sm:$0xff] %v255
    %320 = vst [vmem:[#allocation5 + $0xa8] sm:$0xff] %v256
    %321 = vst [vmem:[#allocation5 + $0xb0] sm:$0xff] %v257
    %322 = vst [vmem:[#allocation5 + $0xb8] sm:$0xff] %v258
    %323 = vst [vmem:[#allocation5 + $0xc0] sm:$0xff] %v259
    %324 = vst [vmem:[#allocation5 + $0xc8] sm:$0xff] %v260
    %325 = vst [vmem:[#allocation5 + $0xd0] sm:$0xff] %v261
    %326 = vst [vmem:[#allocation5 + $0xd8] sm:$0xff] %v262
    %327 = vst [vmem:[#allocation5 + $0xe0] sm:$0xff] %v263
    %328 = vst [vmem:[#allocation5 + $0xe8] sm:$0xff] %v264
    %329 = vst [vmem:[#allocation5 + $0xf0] sm:$0xff] %v265
    %330 = vst [vmem:[#allocation5 + $0xf8] sm:$0xff] %v266
    %331 = vst [vmem:[#allocation5 + $0x100] sm:$0xff] %v267
    %332 = vst [vmem:[#allocation5 + $0x108] sm:$0xff] %v268
    %333 = vst [vmem:[#allocation5 + $0x110] sm:$0xff] %v269
    %334 = vst [vmem:[#allocation5 + $0x118] sm:$0xff] %v270
    %335 = vst [vmem:[#allocation5 + $0x120] sm:$0xff] %v271
    %336 = vst [vmem:[#allocation5 + $0x128] sm:$0xff] %v272
    %337 = vst [vmem:[#allocation5 + $0x130] sm:$0xff] %v273
    %338 = vst [vmem:[#allocation5 + $0x138] sm:$0xff] %v274
    %339 = vst [vmem:[#allocation5 + $0x140] sm:$0xff] %v275
    %340 = vst [vmem:[#allocation5 + $0x148] sm:$0xff] %v276
    %341 = vst [vmem:[#allocation5 + $0x150] sm:$0xff] %v277
    %342 = vst [vmem:[#allocation5 + $0x158] sm:$0xff] %v278
    %343 = vst [vmem:[#allocation5 + $0x160] sm:$0xff] %v279
    %344 = vst [vmem:[#allocation5 + $0x168] sm:$0xff] %v280
    %345 = vst [vmem:[#allocation5 + $0x170] sm:$0xff] %v281
    %346 = vst [vmem:[#allocation5 + $0x178] sm:$0xff] %v282
    %347 = vst [vmem:[#allocation5 + $0x180] sm:$0xff] %v283
    %348 = vst [vmem:[#allocation5 + $0x188] sm:$0xff] %v284
    %349 = vst [vmem:[#allocation5 + $0x190] sm:$0xff] %v285
    %350 = vst [vmem:[#allocation5 + $0x198] sm:$0xff] %v286
    %351 = vst [vmem:[#allocation5 + $0x1a0] sm:$0xff] %v287
    %352 = vst [vmem:[#allocation5 + $0x1a8] sm:$0xff] %v288
    %353 = vst [vmem:[#allocation5 + $0x1b0] sm:$0xff] %v289
    %354 = vst [vmem:[#allocation5 + $0x1b8] sm:$0xff] %v290
    %355 = vst [vmem:[#allocation5 + $0x1c0] sm:$0xff] %v291
    %356 = vst [vmem:[#allocation5 + $0x1c8] sm:$0xff] %v292
    %357 = vst [vmem:[#allocation5 + $0x1d0] sm:$0xff] %v293
    %358 = vst [vmem:[#allocation5 + $0x1d8] sm:$0xff] %v294
    %359 = vst [vmem:[#allocation5 + $0x1e0] sm:$0xff] %v295
    %360 = vst [vmem:[#allocation5 + $0x1e8] sm:$0xff] %v296
    %361 = vst [vmem:[#allocation5 + $0x1f0] sm:$0xff] %v297
    %362 = vst [vmem:[#allocation5 + $0x1f8] sm:$0xff] %v298
    // Predicated region
    $region18: #{tpu_custom_call.1} parent=1 // pred_check
      _
    $region19: #{tpu_custom_call.1} parent=1 // pred_check_branch
      %364 = sbr.rel (0) target = $region21
    $region20: #{tpu_custom_call.1} parent=1 // pred_region
      %s366 = ssub.s32 8192, 8192
      %367 = vsyncadd [#allocation4], %s366
      %s368 = sshll.u32 [#allocation5], 4
      %s369 = int_to_ptr.vmem [resolvable:$true] %s368
      %374 = dma.vmem_to_hbm [thread:$0]  %s369, 8192, %s3, [#allocation4], 128, 128, 8
    $region21: #{tpu_custom_call.1} parent=1 // pred_fallthru
      _
    // Predicated region
    $region22: #{tpu_custom_call.1} parent=1 // pred_check
      _
    $region23: #{tpu_custom_call.1} parent=1 // pred_check_branch
      %376 = sbr.rel (0) target = $region25
    $region24: #{tpu_custom_call.1} parent=1 // pred_region
      %377 = dma.done [#allocation4], 8192
    $region25: #{tpu_custom_call.1} parent=1 // pred_fallthru
      _
    %378 = vsyncpa [#allocation3], 1
    %379 = vsyncpa [#allocation4], 1

</llo_original>
